<compile_context>
chip_gen: v7x
topology: tpu7x:2x2x1
jax: 0.10.0
libtpu: 0.0.40
codegen_flags: <defaults>
</compile_context>

<pallas_src>
import functools
import math

import jax
import jax.numpy as jnp
from jax.experimental import pallas as pl
from jax.experimental.pallas import tpu as pltpu

_LOG2E = 1.4426950408889634  # log2(e); softmax is computed in the exp2 domain


def _flash_attn_kernel(mask_ref, q_ref, k_ref, v_ref, o_ref,
                       m_sc, l_sc, acc_sc, *, scale, mask_scale):
    """One (batch, head, q-tile); grid axis 3 walks KV tiles (reduction, last).

    Blocks seen by the kernel:
      mask_ref (1, 1, tk) | q_ref/o_ref (1, 1, tq, D) | k_ref/v_ref (1, 1, tk, D)
    Scratch resident across the KV axis: m_sc/l_sc (tq, 1) f32, acc_sc (tq, D) f32.
    """
    kv = pl.program_id(3)

    @pl.when(kv == 0)
    def _():
        m_sc[...] = jnp.full(m_sc.shape, -1e30, m_sc.dtype)
        l_sc[...] = jnp.zeros(l_sc.shape, l_sc.dtype)
        acc_sc[...] = jnp.zeros(acc_sc.shape, acc_sc.dtype)

    # Fold log2(e)/sqrt(head_dim) into Q (O(S*D) work instead of O(S^2)); keep the
    # native input dtype so the MXU runs at full rate; accumulate in f32.
    q = q_ref[0, 0] * scale                   # (tq, D)
    k = k_ref[0, 0]                           # (tk, D)
    v = v_ref[0, 0]                           # (tk, D)

    # Q @ K^T contracting the last dim of both operands (no explicit K transpose).
    s = jax.lax.dot_general(
        q, k,
        dimension_numbers=(((1,), (1,)), ((), ())),
        preferred_element_type=jnp.float32,
    )                                         # (tq, tk) f32, base-2 logit domain

    # Additive key mask: log2(e) * (-1e6) * (1 - mask). With everything in the
    # exp2 domain this reproduces softmax(dot/sqrt(d) - 1e6*(1-mask)) exactly.
    bias = (mask_ref[0].astype(jnp.float32) - 1.0) * mask_scale   # (1, tk)
    s = s + bias

    # Online-softmax update (exp2 saves one VPU multiply per score element).
    m_prev = m_sc[...]
    m_new = jnp.maximum(m_prev, jnp.max(s, axis=-1, keepdims=True))
    alpha = jnp.exp2(m_prev - m_new)          # (tq, 1)
    p = jnp.exp2(s - m_new)                   # (tq, tk) f32
    l_sc[...] = alpha * l_sc[...] + jnp.sum(p, axis=-1, keepdims=True)
    acc_sc[...] = alpha * acc_sc[...] + jnp.dot(
        p.astype(v.dtype), v, preferred_element_type=jnp.float32)
    m_sc[...] = m_new

    @pl.when(kv == pl.num_programs(3) - 1)
    def _():
        # Exact divide: runs once per q-tile, so the approx reciprocal bought
        # nothing and cost accuracy (this was the previous correctness miss).
        o_ref[0, 0] = (acc_sc[...] / l_sc[...]).astype(o_ref.dtype)


def _pick_tile(extent, preferred, granule):
    """Largest tile <= preferred that divides `extent` and is a multiple of
    `granule`; small axes use the full extent; fall back to full only if no
    divisor exists (avoids the old catastrophic full-S fallback in most cases)."""
    if extent <= preferred:
        return extent
    t = (preferred // granule) * granule
    while t >= granule:
        if extent % t == 0:
            return t
        t -= granule
    return extent


def _vmem_limit_bytes(tq, tk, D, itemsize):
    """Scoped-VMEM request derived from actual (lane-padded) buffer sizes."""
    lane = 128
    dp = -(-D // lane) * lane
    tkp = -(-tk // lane) * lane
    est = (2 * tq * dp * itemsize            # Q block (double-buffered)
           + 2 * 2 * tk * dp * itemsize      # K, V blocks (double-buffered)
           + 2 * tq * dp * itemsize          # output block (double-buffered)
           + 2 * tkp * 4                     # mask block
           + (2 * tq * lane + tq * dp) * 4   # m/l/acc scratch (f32, lane-padded)
           + 2 * tq * tkp * 4)               # s / p f32 temporaries
    return int(min(48 * 2 ** 20, max(2 * est, 16 * 2 ** 20)))


def softmax_attention(Q, K, V, mask, head_dim):
    """Equivalent of SoftmaxAttention.forward (eval mode: dropout = identity)."""
    B, H, S, D = Q.shape
    # Head-blocked tiling: one head per block, so VMEM footprint is independent of
    # H and the head axis becomes an extra "parallel" grid dimension (megacore).
    tq = _pick_tile(S, 512, 8)      # query tile
    tk = _pick_tile(S, 512, 128)    # key/value tile (reduction axis, last in grid)
    nq, nk = S // tq, S // tk
    scale = _LOG2E / math.sqrt(head_dim)
    mask_scale = _LOG2E * 1000000.0

    mask3 = mask.reshape(B, 1, S)   # keeps the (1, 1, tk) mask block layout legal

    kernel = functools.partial(_flash_attn_kernel, scale=scale,
                               mask_scale=mask_scale)

    return pl.pallas_call(
        kernel,
        out_shape=jax.ShapeDtypeStruct((B, H, S, D), Q.dtype),
        grid_spec=pltpu.PrefetchScalarGridSpec(
            num_scalar_prefetch=0,
            grid=(B, H, nq, nk),               # KV (reduction) axis last
            in_specs=[
                pl.BlockSpec((1, 1, tk), lambda b, h, qi, ki: (b, 0, ki)),        # mask
                pl.BlockSpec((1, 1, tq, D), lambda b, h, qi, ki: (b, h, qi, 0)),  # Q
                pl.BlockSpec((1, 1, tk, D), lambda b, h, qi, ki: (b, h, ki, 0)),  # K
                pl.BlockSpec((1, 1, tk, D), lambda b, h, qi, ki: (b, h, ki, 0)),  # V
            ],
            out_specs=pl.BlockSpec((1, 1, tq, D),
                                   lambda b, h, qi, ki: (b, h, qi, 0)),
            scratch_shapes=[
                pltpu.VMEM((tq, 1), jnp.float32),   # running max (base-2 domain)
                pltpu.VMEM((tq, 1), jnp.float32),   # running denominator
                pltpu.VMEM((tq, D), jnp.float32),   # output accumulator
            ],
        ),
        compiler_params=pltpu.CompilerParams(
            dimension_semantics=("parallel", "parallel", "parallel", "arbitrary"),
            vmem_limit_bytes=_vmem_limit_bytes(tq, tk, D, Q.dtype.itemsize),
        ),
    )(mask3, Q, K, V)


def softmax_attention_ref(Q, K, V, mask, head_dim):
    hi = jax.lax.Precision.HIGHEST
    dot = jnp.einsum("bhqd,bhkd->bhqk", Q, K, precision=hi) / math.sqrt(head_dim)
    dot = dot - 1000000.0 * (1.0 - mask[:, None, None, :])
    attn = jax.nn.softmax(dot, axis=-1)
    return jnp.einsum("bhqk,bhkd->bhqd", attn, V, precision=hi)


if __name__ == "__main__":
    B, H, S, D = 2, 4, 8, 32  # batch, heads, seq, head_dim
    key = jax.random.PRNGKey(0)
    kq, kk, kv, km = jax.random.split(key, 4)

    Q = jax.random.normal(kq, (B, H, S, D), dtype=jnp.float32)
    K = jax.random.normal(kk, (B, H, S, D), dtype=jnp.float32)
    V = jax.random.normal(kv, (B, H, S, D), dtype=jnp.float32)
    # binary mask: 1 = attend, 0 = masked (last two key positions of batch 1 masked)
    mask = jnp.ones((B, S), dtype=jnp.float32).at[1, -2:].set(0.0)

    out = jax.block_until_ready(softmax_attention(Q, K, V, mask, head_dim=D))
    ref = softmax_attention_ref(Q, K, V, mask, head_dim=D)

    assert out.shape == (B, H, S, D)
    # Kernel matmuls use default MXU precision for f32 inputs, reference uses
    # HIGHEST; compare at the 1e-2 level (interpret mode agrees to ~1e-6).
    assert jnp.allclose(out, ref, atol=2e-2, rtol=2e-2), "mismatch vs reference"

    print("KERNEL_OK")
</pallas_src>

<mosaic_0001>
module attributes {stable_mosaic.version = 11 : i64} {
  func.func @_flash_attn_kernel(%arg0: i32, %arg1: i32, %arg2: i32, %arg3: i32, %arg4: memref<1x1x8xf32, #tpu.memory_space<vmem>>, %arg5: memref<1x1x8x32xf32, #tpu.memory_space<vmem>>, %arg6: memref<1x1x8x32xf32, #tpu.memory_space<vmem>>, %arg7: memref<1x1x8x32xf32, #tpu.memory_space<vmem>>, %arg8: memref<1x1x8x32xf32, #tpu.memory_space<vmem>>, %arg9: memref<8x1xf32, #tpu.memory_space<vmem>>, %arg10: memref<8x1xf32, #tpu.memory_space<vmem>>, %arg11: memref<8x32xf32, #tpu.memory_space<vmem>>) attributes {dimension_semantics = [#tpu.dimension_semantics<parallel>, #tpu.dimension_semantics<parallel>, #tpu.dimension_semantics<parallel>, #tpu.dimension_semantics<arbitrary>], iteration_bounds = array<i64: 2, 4, 1, 1>, scalar_prefetch = 0 : i64, scratch_operands = 3 : i64, tpu.core_type = #tpu.core_type<tc>, window_params = [{transform_indices = @transform_0, window_bounds = array<i64: 1, 1, 8>}, {transform_indices = @transform_1, window_bounds = array<i64: 1, 1, 8, 32>}, {transform_indices = @transform_2, window_bounds = array<i64: 1, 1, 8, 32>}, {transform_indices = @transform_3, window_bounds = array<i64: 1, 1, 8, 32>}, {transform_indices = @transform_4, window_bounds = array<i64: 1, 1, 8, 32>}]} {
    %c0_i32 = arith.constant 0 : i32
    %0 = arith.cmpi eq, %arg3, %c0_i32 : i32
    %1 = arith.extui %0 : i1 to i32
    %c0_i32_0 = arith.constant 0 : i32
    %2 = arith.cmpi ne, %1, %c0_i32_0 : i32
    scf.if %2 {
      %cst_35 = arith.constant -1.000000e+30 : f32
      %45 = vector.broadcast %cst_35 : f32 to vector<8x1xf32>
      %c0_36 = arith.constant 0 : index
      %c0_37 = arith.constant 0 : index
      %46 = vector.load %arg9[%c0_36, %c0_37] : memref<8x1xf32, #tpu.memory_space<vmem>>, vector<8x1xf32>
      tpu.vector_store %arg9[%c0_36, %c0_37], %45 {strides = array<i32>} : memref<8x1xf32, #tpu.memory_space<vmem>>, vector<8x1xf32>,
      %cst_38 = arith.constant 0.000000e+00 : f32
      %47 = vector.broadcast %cst_38 : f32 to vector<8x1xf32>
      %c0_39 = arith.constant 0 : index
      %c0_40 = arith.constant 0 : index
      %48 = vector.load %arg10[%c0_39, %c0_40] : memref<8x1xf32, #tpu.memory_space<vmem>>, vector<8x1xf32>
      tpu.vector_store %arg10[%c0_39, %c0_40], %47 {strides = array<i32>} : memref<8x1xf32, #tpu.memory_space<vmem>>, vector<8x1xf32>,
      %cst_41 = arith.constant 0.000000e+00 : f32
      %49 = vector.broadcast %cst_41 : f32 to vector<8x32xf32>
      %c0_42 = arith.constant 0 : index
      %c0_43 = arith.constant 0 : index
      %50 = vector.load %arg11[%c0_42, %c0_43] : memref<8x32xf32, #tpu.memory_space<vmem>>, vector<8x32xf32>
      tpu.vector_store %arg11[%c0_42, %c0_43], %49 {strides = array<i32>} : memref<8x32xf32, #tpu.memory_space<vmem>>, vector<8x32xf32>,
    } else {
    }
    %c0 = arith.constant 0 : index
    %c0_1 = arith.constant 0 : index
    %c0_2 = arith.constant 0 : index
    %c0_3 = arith.constant 0 : index
    %3 = vector.load %arg5[%c0, %c0_1, %c0_2, %c0_3] : memref<1x1x8x32xf32, #tpu.memory_space<vmem>>, vector<1x1x8x32xf32>
    %4 = vector.shape_cast %3 : vector<1x1x8x32xf32> to vector<8x32xf32>
    %cst = arith.constant 0.255034864 : f32
    %5 = vector.broadcast %cst : f32 to vector<8x32xf32>
    %6 = arith.mulf %4, %5 : vector<8x32xf32>
    %c0_4 = arith.constant 0 : index
    %c0_5 = arith.constant 0 : index
    %c0_6 = arith.constant 0 : index
    %c0_7 = arith.constant 0 : index
    %7 = vector.load %arg6[%c0_4, %c0_5, %c0_6, %c0_7] : memref<1x1x8x32xf32, #tpu.memory_space<vmem>>, vector<1x1x8x32xf32>
    %8 = vector.shape_cast %7 : vector<1x1x8x32xf32> to vector<8x32xf32>
    %c0_8 = arith.constant 0 : index
    %c0_9 = arith.constant 0 : index
    %c0_10 = arith.constant 0 : index
    %c0_11 = arith.constant 0 : index
    %9 = vector.load %arg7[%c0_8, %c0_9, %c0_10, %c0_11] : memref<1x1x8x32xf32, #tpu.memory_space<vmem>>, vector<1x1x8x32xf32>
    %10 = vector.shape_cast %9 : vector<1x1x8x32xf32> to vector<8x32xf32>
    %cst_12 = arith.constant dense<0.000000e+00> : vector<8x8xf32>
    %11 = tpu.matmul %6, %8, %cst_12 {dimension_numbers = #tpu.dot_dimension_numbers<[1], [1], [0], [0], [0, 0, 1, 0], [], []>} : vector<8x32xf32>, vector<8x32xf32>, vector<8x8xf32> -> vector<8x8xf32>
    %c0_13 = arith.constant 0 : index
    %c0_14 = arith.constant 0 : index
    %c0_15 = arith.constant 0 : index
    %12 = vector.load %arg4[%c0_13, %c0_14, %c0_15] : memref<1x1x8xf32, #tpu.memory_space<vmem>>, vector<1x1x8xf32>
    %13 = vector.shape_cast %12 : vector<1x1x8xf32> to vector<1x8xf32>
    %cst_16 = arith.constant 1.000000e+00 : f32
    %14 = vector.broadcast %cst_16 : f32 to vector<1x8xf32>
    %15 = arith.subf %13, %14 : vector<1x8xf32>
    %cst_17 = arith.constant 0x49B01C38 : f32
    %16 = vector.broadcast %cst_17 : f32 to vector<1x8xf32>
    %17 = arith.mulf %15, %16 : vector<1x8xf32>
    %18 = vector.broadcast %17 : vector<1x8xf32> to vector<8x8xf32>
    %19 = arith.addf %11, %18 : vector<8x8xf32>
    %c0_18 = arith.constant 0 : index
    %c0_19 = arith.constant 0 : index
    %20 = vector.load %arg9[%c0_18, %c0_19] : memref<8x1xf32, #tpu.memory_space<vmem>>, vector<8x1xf32>
    %cst_20 = arith.constant dense<0xFF800000> : vector<8xf32>
    %21 = vector.multi_reduction <maximumf>, %19, %cst_20 [1] : vector<8x8xf32> to vector<8xf32>
    %22 = vector.shape_cast %21 : vector<8xf32> to vector<8x1xf32>
    %23 = arith.maximumf %20, %22 : vector<8x1xf32>
    %24 = arith.subf %20, %23 : vector<8x1xf32>
    %25 = math.exp2 %24 : vector<8x1xf32>
    %26 = vector.broadcast %23 : vector<8x1xf32> to vector<8x8xf32>
    %27 = arith.subf %19, %26 : vector<8x8xf32>
    %28 = math.exp2 %27 : vector<8x8xf32>
    %c0_21 = arith.constant 0 : index
    %c0_22 = arith.constant 0 : index
    %29 = vector.load %arg10[%c0_21, %c0_22] : memref<8x1xf32, #tpu.memory_space<vmem>>, vector<8x1xf32>
    %30 = arith.mulf %25, %29 : vector<8x1xf32>
    %cst_23 = arith.constant dense<0.000000e+00> : vector<8xf32>
    %31 = vector.multi_reduction <add>, %28, %cst_23 [1] : vector<8x8xf32> to vector<8xf32>
    %32 = vector.shape_cast %31 : vector<8xf32> to vector<8x1xf32>
    %33 = arith.addf %30, %32 : vector<8x1xf32>
    %c0_24 = arith.constant 0 : index
    %c0_25 = arith.constant 0 : index
    %34 = vector.load %arg10[%c0_24, %c0_25] : memref<8x1xf32, #tpu.memory_space<vmem>>, vector<8x1xf32>
    tpu.vector_store %arg10[%c0_24, %c0_25], %33 {strides = array<i32>} : memref<8x1xf32, #tpu.memory_space<vmem>>, vector<8x1xf32>,
    %c0_26 = arith.constant 0 : index
    %c0_27 = arith.constant 0 : index
    %35 = vector.load %arg11[%c0_26, %c0_27] : memref<8x32xf32, #tpu.memory_space<vmem>>, vector<8x32xf32>
    %36 = vector.broadcast %25 : vector<8x1xf32> to vector<8x32xf32>
    %37 = arith.mulf %36, %35 : vector<8x32xf32>
    %cst_28 = arith.constant dense<0.000000e+00> : vector<8x32xf32>
    %38 = tpu.matmul %28, %10, %cst_28 {dimension_numbers = #tpu.dot_dimension_numbers<[1], [0], [0], [1], [0, 0, 1, 1], [], []>} : vector<8x8xf32>, vector<8x32xf32>, vector<8x32xf32> -> vector<8x32xf32>
    %39 = arith.addf %37, %38 : vector<8x32xf32>
    %c0_29 = arith.constant 0 : index
    %c0_30 = arith.constant 0 : index
    %40 = vector.load %arg11[%c0_29, %c0_30] : memref<8x32xf32, #tpu.memory_space<vmem>>, vector<8x32xf32>
    tpu.vector_store %arg11[%c0_29, %c0_30], %39 {strides = array<i32>} : memref<8x32xf32, #tpu.memory_space<vmem>>, vector<8x32xf32>,
    %c0_31 = arith.constant 0 : index
    %c0_32 = arith.constant 0 : index
    %41 = vector.load %arg9[%c0_31, %c0_32] : memref<8x1xf32, #tpu.memory_space<vmem>>, vector<8x1xf32>
    tpu.vector_store %arg9[%c0_31, %c0_32], %23 {strides = array<i32>} : memref<8x1xf32, #tpu.memory_space<vmem>>, vector<8x1xf32>,
    %c0_i32_33 = arith.constant 0 : i32
    %42 = arith.cmpi eq, %arg3, %c0_i32_33 : i32
    %43 = arith.extui %42 : i1 to i32
    %c0_i32_34 = arith.constant 0 : i32
    %44 = arith.cmpi ne, %43, %c0_i32_34 : i32
    scf.if %44 {
      %c0_35 = arith.constant 0 : index
      %c0_36 = arith.constant 0 : index
      %45 = vector.load %arg11[%c0_35, %c0_36] : memref<8x32xf32, #tpu.memory_space<vmem>>, vector<8x32xf32>
      %c0_37 = arith.constant 0 : index
      %c0_38 = arith.constant 0 : index
      %46 = vector.load %arg10[%c0_37, %c0_38] : memref<8x1xf32, #tpu.memory_space<vmem>>, vector<8x1xf32>
      %47 = vector.broadcast %46 : vector<8x1xf32> to vector<8x32xf32>
      %48 = arith.divf %45, %47 : vector<8x32xf32>
      %c0_39 = arith.constant 0 : index
      %c0_40 = arith.constant 0 : index
      %c0_41 = arith.constant 0 : index
      %c0_42 = arith.constant 0 : index
      %49 = vector.load %arg8[%c0_39, %c0_40, %c0_41, %c0_42] : memref<1x1x8x32xf32, #tpu.memory_space<vmem>>, vector<1x1x8x32xf32>
      %50 = vector.shape_cast %49 : vector<1x1x8x32xf32> to vector<8x32xf32>
      %51 = vector.shape_cast %48 : vector<8x32xf32> to vector<1x1x8x32xf32>
      tpu.vector_store %arg8[%c0_39, %c0_40, %c0_41, %c0_42], %51 {strides = array<i32>} : memref<1x1x8x32xf32, #tpu.memory_space<vmem>>, vector<1x1x8x32xf32>,
    } else {
    }
    return
  }
  func.func @transform_0(%arg0: i32, %arg1: i32, %arg2: i32, %arg3: i32) -> (i32, i32, i32) {
    %c0_i32 = arith.constant 0 : i32
    %c0_i32_0 = arith.constant 0 : i32
    return %arg0, %c0_i32, %arg3 : i32, i32, i32
  }
  func.func @transform_1(%arg0: i32, %arg1: i32, %arg2: i32, %arg3: i32) -> (i32, i32, i32, i32) {
    %c0_i32 = arith.constant 0 : i32
    %c0_i32_0 = arith.constant 0 : i32
    return %arg0, %arg1, %arg2, %c0_i32 : i32, i32, i32, i32
  }
  func.func @transform_2(%arg0: i32, %arg1: i32, %arg2: i32, %arg3: i32) -> (i32, i32, i32, i32) {
    %c0_i32 = arith.constant 0 : i32
    %c0_i32_0 = arith.constant 0 : i32
    return %arg0, %arg1, %arg3, %c0_i32 : i32, i32, i32, i32
  }
  func.func @transform_3(%arg0: i32, %arg1: i32, %arg2: i32, %arg3: i32) -> (i32, i32, i32, i32) {
    %c0_i32 = arith.constant 0 : i32
    %c0_i32_0 = arith.constant 0 : i32
    return %arg0, %arg1, %arg3, %c0_i32 : i32, i32, i32, i32
  }
  func.func @transform_4(%arg0: i32, %arg1: i32, %arg2: i32, %arg3: i32) -> (i32, i32, i32, i32) {
    %c0_i32 = arith.constant 0 : i32
    %c0_i32_0 = arith.constant 0 : i32
    return %arg0, %arg1, %arg2, %c0_i32 : i32, i32, i32, i32
  }
}

</mosaic_0001>

<llo_original>
// kernel: tpu_custom_call.1
$region0: #{tpu_custom_call.1}
  #allocation0 [shape = 'u32[]', space=smem, size = 0x4, offset = 0x4, fixed_abs, tag = 'smem constant byte address 0x4 - core index']
  #allocation1 [shape = 'u32[144,128]{1,0:T(1,128)}', space=vmem, size = 0x12000, scoped, tag = 'internal scratch']
  #allocation2 [shape = 'f32[8,1]{1,0:T(8,128)}', space=vmem, size = 0x1000, scoped, tag = 'scratch operand']
  #allocation3 [shape = 'f32[8,1]{1,0:T(8,128)}', space=vmem, size = 0x1000, scoped, tag = 'scratch operand']
  #allocation4 [shape = 'f32[8,32]{1,0:T(8,128)}', space=vmem, size = 0x1000, scoped, tag = 'scratch operand']
  %s0 = inlined_call_operand.hbm [shape: f32[2,1,8], index: 0, kind: input, shape index: {}]
  %s1 = inlined_call_operand.hbm [shape: f32[2,4,8,32], index: 1, kind: input, shape index: {}]
  %s2 = inlined_call_operand.hbm [shape: f32[2,4,8,32], index: 2, kind: input, shape index: {}]
  %s3 = inlined_call_operand.hbm [shape: f32[2,4,8,32], index: 3, kind: input, shape index: {}]
  %s4 = inlined_call_operand.hbm [shape: f32[2,4,8,32], index: 4, kind: output, shape index: {}]
  %s5 = sld [smem:[#allocation0]]
  $region73: #{tpu_custom_call.1} parent=0
    _
  %s7 = ssub.s32 1, %s5
  %s8 = scalar_select 0, %s7, %s5
  $region1: #{tpu_custom_call.1} parent=0
    #allocation5 [shape = 'u8[1024]{0}', space=vmem, size = 0x400, scoped, tag = 'input window, operand 0']
    #allocation6 [shape = 's32[2]{0}', space=sflag, size = 0x8, scoped, tag = 'scoped memory for tpu_custom_call.1']
    #allocation7 [shape = 's32[2]{0}', space=sflag, size = 0x8, scoped, tag = 'scoped memory for tpu_custom_call.1']
    #allocation8 [shape = 'u8[8192]{0}', space=vmem, size = 0x2000, scoped, tag = 'input window, operand 1']
    #allocation9 [shape = 's32[2]{0}', space=sflag, size = 0x8, scoped, tag = 'scoped memory for tpu_custom_call.1']
    #allocation10 [shape = 'u8[8192]{0}', space=vmem, size = 0x2000, scoped, tag = 'input window, operand 2']
    #allocation11 [shape = 'u8[8192]{0}', space=vmem, size = 0x2000, scoped, tag = 'input window, operand 3']
    #allocation12 [shape = 's32[2]{0}', space=sflag, size = 0x8, scoped, tag = 'scoped memory for tpu_custom_call.1']
    #allocation13 [shape = 'u8[8192]{0}', space=vmem, size = 0x2000, scoped, tag = 'output window, operand 0']
    %9 = vsyncpa [#allocation6], 0
    %s10 = scalar_lea.sflag [#allocation6], 1
    %11 = vsyncpa %s10, 0
    %12 = vsyncpa [#allocation9], 0
    %s13 = scalar_lea.sflag [#allocation9], 1
    %14 = vsyncpa %s13, 0
    %15 = vsyncpa [#allocation12], 0
    %s16 = scalar_lea.sflag [#allocation12], 1
    %17 = vsyncpa %s16, 0
    %18 = vsyncpa [#allocation7], 0
    %s19 = scalar_lea.sflag [#allocation7], 1
    %20 = vsyncpa %s19, 0
    loop: start=0, step=1, limit=10
    $region2: #{tpu_custom_call.1} parent=1 // loop_pre_header
      _
    $region3: #{tpu_custom_call.1} parent=1 // loop_header
      %s22 = sphi 0, %s26
      %p23 = scmp.ge.s32.totalorder %s22, 10
      %s29 = sphi 0, %s55
      %s30 = sphi 0, %s51
      %s31 = sphi 0, %s47
      %s32 = sphi 0, %s43
      %s33 = sphi 0, %s29
      %s34 = sphi 0, %s30
      %s35 = sphi 0, %s31
      %s36 = sphi 0, %s32
      %s37 = sphi 0, %s33
      %s38 = sphi 0, %s34
      %s39 = sphi 0, %s35
      %s40 = sphi 0, %s36
      %s60 = sphi 0, %s62
      %s63 = sphi 0, %s60
      %s64 = sphi 0, %s63
      %s80 = sphi 0, %s64
      %s90 = sphi 0, %s92
      %s93 = sphi 0, %s90
      %s94 = sphi 0, %s93
      %s110 = sphi 0, %s94
      %s120 = sphi 0, %s122
      %s123 = sphi 0, %s120
      %s124 = sphi 0, %s123
      %s140 = sphi 0, %s124
      %s150 = sphi 0, %s152
      %s153 = sphi 0, %s150
      %s154 = sphi 0, %s153
      %s170 = sphi 0, %s154
      %s180 = sphi 0, %s182
      %s183 = sphi 0, %s180
      %s184 = sphi 0, %s183
      %s200 = sphi 0, %s184
    $region4: #{tpu_custom_call.1} parent=1 // loop_header_branch
      %25 = sbr.rel (%p23) target = $region8
    $region5: #{tpu_custom_call.1} parent=1 // loop_body
      %s27 = ssub.s32 %s22, 1
      %s28 = ssub.s32 %s22, 2
      %s41 = sadd.s32 1, %s32
      %p42 = scmp.ge.s32.totalorder %s41, 1
      %s43 = scalar_select %p42, 0, %s41
      %s44 = sadd.s32 1, %s31
      %s45 = scalar_select %p42, %s44, %s31
      %p46 = scmp.ge.s32.totalorder %s45, 1
      %s47 = scalar_select %p46, 0, %s45
      %s48 = sadd.s32 1, %s30
      %s49 = scalar_select %p46, %s48, %s30
      %p50 = scmp.ge.s32.totalorder %s49, 4
      %s51 = scalar_select %p50, 0, %s49
      %s52 = sadd.s32 1, %s29
      %s53 = scalar_select %p50, %s52, %s29
      %p54 = scmp.ge.s32.totalorder %s53, 2
      %s55 = scalar_select %p54, 0, %s53
      %s56 = ssub.s32 %s29, %s55
      %s57 = ssub.s32 %s32, %s43
      %s58 = sor.u32 %s56, %s57
      %p59 = scmp.eq.s32.totalorder %s58, 0
      %s61 = sadd.s32 %s60, 1
      %s62 = scalar_select %p59, %s60, %s61
      %p65 = pneg %p59
      %p66 = scmp.eq.s32.totalorder %s22, 7
      %p67 = por %p65, %p66
      %p68 = scmp.ne.s32.totalorder %s60, %s63
      %p69 = scmp.eq.s32.totalorder %s22, 0
      %p70 = por %p68, %p69
      %p71 = scmp.ne.s32.totalorder %s60, %s63
      %p72 = scmp.eq.s32.totalorder %s27, 7
      %p73 = por %p71, %p72
      %p74 = scmp.ne.s32.totalorder %s63, %s64
      %p75 = scmp.eq.s32.totalorder %s27, 0
      %p76 = por %p74, %p75
      %p77 = scmp.ne.s32.totalorder %s63, %s64
      %p78 = scmp.eq.s32.totalorder %s28, 7
      %p79 = por %p77, %p78
      %p81 = scmp.ne.s32.totalorder %s64, %s80
      %p82 = scmp.eq.s32.totalorder %s28, 0
      %p83 = por %p81, %p82
      %s84 = ssub.s32 %s29, %s55
      %s85 = ssub.s32 %s30, %s51
      %s86 = sor.u32 %s84, %s85
      %s87 = ssub.s32 %s31, %s47
      %s88 = sor.u32 %s86, %s87
      %p89 = scmp.eq.s32.totalorder %s88, 0
      %s91 = sadd.s32 %s90, 1
      %s92 = scalar_select %p89, %s90, %s91
      %p95 = pneg %p89
      %p96 = scmp.eq.s32.totalorder %s22, 7
      %p97 = por %p95, %p96
      %p98 = scmp.ne.s32.totalorder %s90, %s93
      %p99 = scmp.eq.s32.totalorder %s22, 0
      %p100 = por %p98, %p99
      %p101 = scmp.ne.s32.totalorder %s90, %s93
      %p102 = scmp.eq.s32.totalorder %s27, 7
      %p103 = por %p101, %p102
      %p104 = scmp.ne.s32.totalorder %s93, %s94
      %p105 = scmp.eq.s32.totalorder %s27, 0
      %p106 = por %p104, %p105
      %p107 = scmp.ne.s32.totalorder %s93, %s94
      %p108 = scmp.eq.s32.totalorder %s28, 7
      %p109 = por %p107, %p108
      %p111 = scmp.ne.s32.totalorder %s94, %s110
      %p112 = scmp.eq.s32.totalorder %s28, 0
      %p113 = por %p111, %p112
      %s114 = ssub.s32 %s29, %s55
      %s115 = ssub.s32 %s30, %s51
      %s116 = sor.u32 %s114, %s115
      %s117 = ssub.s32 %s32, %s43
      %s118 = sor.u32 %s116, %s117
      %p119 = scmp.eq.s32.totalorder %s118, 0
      %s121 = sadd.s32 %s120, 1
      %s122 = scalar_select %p119, %s120, %s121
      %p125 = pneg %p119
      %p126 = scmp.eq.s32.totalorder %s22, 7
      %p127 = por %p125, %p126
      %p128 = scmp.ne.s32.totalorder %s120, %s123
      %p129 = scmp.eq.s32.totalorder %s22, 0
      %p130 = por %p128, %p129
      %p131 = scmp.ne.s32.totalorder %s120, %s123
      %p132 = scmp.eq.s32.totalorder %s27, 7
      %p133 = por %p131, %p132
      %p134 = scmp.ne.s32.totalorder %s123, %s124
      %p135 = scmp.eq.s32.totalorder %s27, 0
      %p136 = por %p134, %p135
      %p137 = scmp.ne.s32.totalorder %s123, %s124
      %p138 = scmp.eq.s32.totalorder %s28, 7
      %p139 = por %p137, %p138
      %p141 = scmp.ne.s32.totalorder %s124, %s140
      %p142 = scmp.eq.s32.totalorder %s28, 0
      %p143 = por %p141, %p142
      %s144 = ssub.s32 %s29, %s55
      %s145 = ssub.s32 %s30, %s51
      %s146 = sor.u32 %s144, %s145
      %s147 = ssub.s32 %s32, %s43
      %s148 = sor.u32 %s146, %s147
      %p149 = scmp.eq.s32.totalorder %s148, 0
      %s151 = sadd.s32 %s150, 1
      %s152 = scalar_select %p149, %s150, %s151
      %p155 = pneg %p149
      %p156 = scmp.eq.s32.totalorder %s22, 7
      %p157 = por %p155, %p156
      %p158 = scmp.ne.s32.totalorder %s150, %s153
      %p159 = scmp.eq.s32.totalorder %s22, 0
      %p160 = por %p158, %p159
      %p161 = scmp.ne.s32.totalorder %s150, %s153
      %p162 = scmp.eq.s32.totalorder %s27, 7
      %p163 = por %p161, %p162
      %p164 = scmp.ne.s32.totalorder %s153, %s154
      %p165 = scmp.eq.s32.totalorder %s27, 0
      %p166 = por %p164, %p165
      %p167 = scmp.ne.s32.totalorder %s153, %s154
      %p168 = scmp.eq.s32.totalorder %s28, 7
      %p169 = por %p167, %p168
      %p171 = scmp.ne.s32.totalorder %s154, %s170
      %p172 = scmp.eq.s32.totalorder %s28, 0
      %p173 = por %p171, %p172
      %s174 = ssub.s32 %s29, %s55
      %s175 = ssub.s32 %s30, %s51
      %s176 = sor.u32 %s174, %s175
      %s177 = ssub.s32 %s31, %s47
      %s178 = sor.u32 %s176, %s177
      %p179 = scmp.eq.s32.totalorder %s178, 0
      %s181 = sadd.s32 %s180, 1
      %s182 = scalar_select %p179, %s180, %s181
      %p185 = pneg %p179
      %p186 = scmp.eq.s32.totalorder %s22, 7
      %p187 = por %p185, %p186
      %p188 = scmp.ne.s32.totalorder %s180, %s183
      %p189 = scmp.eq.s32.totalorder %s22, 0
      %p190 = por %p188, %p189
      %p191 = scmp.ne.s32.totalorder %s180, %s183
      %p192 = scmp.eq.s32.totalorder %s27, 7
      %p193 = por %p191, %p192
      %p194 = scmp.ne.s32.totalorder %s183, %s184
      %p195 = scmp.eq.s32.totalorder %s27, 0
      %p196 = por %p194, %p195
      %p197 = scmp.ne.s32.totalorder %s183, %s184
      %p198 = scmp.eq.s32.totalorder %s28, 7
      %p199 = por %p197, %p198
      %p201 = scmp.ne.s32.totalorder %s184, %s200
      %p202 = scmp.eq.s32.totalorder %s28, 0
      %p203 = por %p201, %p202
      %p204 = scmp.le.s32.totalorder 1, %s22
      %p205 = scmp.lt.s32.totalorder %s22, 9
      %p206 = pnand %p204, %p205
      %p207 = pneg %p206
      // Predicated region
      $region9: #{tpu_custom_call.1} parent=5 // pred_check
        _
      $region10: #{tpu_custom_call.1} parent=5 // pred_check_branch
        %209 = sbr.rel (%p206) target = $region12
      $region11: #{tpu_custom_call.1} parent=5 // pred_region
        %s210 = ssub.s32 %s22, 1
      $region12: #{tpu_custom_call.1} parent=5 // pred_fallthru
        _
      %p211 = scmp.lt.s32.totalorder %s22, 8
      // Predicated region
      $region13: #{tpu_custom_call.1} parent=5 // pred_check
        %p212 = pneg %p211
      $region14: #{tpu_custom_call.1} parent=5 // pred_check_branch
        %214 = sbr.rel (%p212) target = $region16
      $region15: #{tpu_custom_call.1} parent=5 // pred_region
        // Predicated region
        $region17: #{tpu_custom_call.1} parent=15 // pred_check
          %p215 = pneg %p70
        $region18: #{tpu_custom_call.1} parent=15 // pred_check_branch
          %217 = sbr.rel (%p215) target = $region20
        $region19: #{tpu_custom_call.1} parent=15 // pred_region
          %s218 = sand.u32 %s60, 1
          %s219 = scalar_lea.sflag [#allocation6], %s218
          %s220 = sand.u32 %s60, 1
          %s221 = scalar_lea.vmem [#allocation5], %s220
          %s223 = ssub.s32 16, 16
          %224 = vsyncadd %s219, %s223
          %s225 = sadd.s32 %s32, %s29
          %s226 = smul.addr %s225, 16
          %s227 = scalar_lea.hbm %s0, %s226
          %s229 = sshll.u32 %s221, 4
          %s230 = int_to_ptr.vmem [resolvable:$true] %s229
          %232 = dma.hbm_to_vmem [thread:$0]  %s227, 16, %s230, %s219
        $region20: #{tpu_custom_call.1} parent=15 // pred_fallthru
          _
        // Predicated region
        $region21: #{tpu_custom_call.1} parent=15 // pred_check
          %p233 = pneg %p100
        $region22: #{tpu_custom_call.1} parent=15 // pred_check_branch
          %235 = sbr.rel (%p233) target = $region24
        $region23: #{tpu_custom_call.1} parent=15 // pred_region
          %s236 = sand.u32 %s22, 1
          %s237 = scalar_lea.sflag [#allocation9], %s236
          %s238 = sand.u32 %s90, 1
          %s239 = smul.addr %s238, 8
          %s240 = scalar_lea.vmem [#allocation8], %s239
          %s242 = ssub.s32 128, 128
          %243 = vsyncadd %s237, %s242
          %s244 = sadd.s32 %s31, %s30
          %s245 = smul.addr %s29, 4
          %s246 = sadd.s32 %s244, %s245
          %s247 = smul.addr %s246, 128
          %s248 = scalar_lea.hbm %s1, %s247
          %s250 = sshll.u32 %s240, 4
          %s251 = int_to_ptr.vmem [resolvable:$true] %s250
          %253 = dma.hbm_to_vmem [thread:$0]  %s248, 128, %s251, %s237
        $region24: #{tpu_custom_call.1} parent=15 // pred_fallthru
          _
        // Predicated region
        $region25: #{tpu_custom_call.1} parent=15 // pred_check
          %p254 = pneg %p130
        $region26: #{tpu_custom_call.1} parent=15 // pred_check_branch
          %256 = sbr.rel (%p254) target = $region28
        $region27: #{tpu_custom_call.1} parent=15 // pred_region
          %s257 = sand.u32 %s22, 1
          %s258 = scalar_lea.sflag [#allocation9], %s257
          %s259 = sand.u32 %s120, 1
          %s260 = smul.addr %s259, 8
          %s261 = scalar_lea.vmem [#allocation10], %s260
          %s263 = ssub.s32 128, 128
          %264 = vsyncadd %s258, %s263
          %s265 = sadd.s32 %s32, %s30
          %s266 = smul.addr %s29, 4
          %s267 = sadd.s32 %s265, %s266
          %s268 = smul.addr %s267, 128
          %s269 = scalar_lea.hbm %s2, %s268
          %s271 = sshll.u32 %s261, 4
          %s272 = int_to_ptr.vmem [resolvable:$true] %s271
          %274 = dma.hbm_to_vmem [thread:$0]  %s269, 128, %s272, %s258
        $region28: #{tpu_custom_call.1} parent=15 // pred_fallthru
          _
        // Predicated region
        $region29: #{tpu_custom_call.1} parent=15 // pred_check
          %p275 = pneg %p160
        $region30: #{tpu_custom_call.1} parent=15 // pred_check_branch
          %277 = sbr.rel (%p275) target = $region32
        $region31: #{tpu_custom_call.1} parent=15 // pred_region
          %s278 = sand.u32 %s150, 1
          %s279 = scalar_lea.sflag [#allocation12], %s278
          %s280 = sand.u32 %s150, 1
          %s281 = smul.addr %s280, 8
          %s282 = scalar_lea.vmem [#allocation11], %s281
          %s284 = ssub.s32 128, 128
          %285 = vsyncadd %s279, %s284
          %s286 = sadd.s32 %s32, %s30
          %s287 = smul.addr %s29, 4
          %s288 = sadd.s32 %s286, %s287
          %s289 = smul.addr %s288, 128
          %s290 = scalar_lea.hbm %s3, %s289
          %s292 = sshll.u32 %s282, 4
          %s293 = int_to_ptr.vmem [resolvable:$true] %s292
          %295 = dma.hbm_to_vmem [thread:$0]  %s290, 128, %s293, %s279
        $region32: #{tpu_custom_call.1} parent=15 // pred_fallthru
          _
      $region16: #{tpu_custom_call.1} parent=5 // pred_fallthru
        _
      %p296 = scmp.le.s32.totalorder 1, %s22
      %p297 = scmp.lt.s32.totalorder %s22, 9
      %p298 = pnand %p296, %p297
      %p299 = pneg %p298
      // Predicated region
      $region33: #{tpu_custom_call.1} parent=5 // pred_check
        _
      $region34: #{tpu_custom_call.1} parent=5 // pred_check_branch
        %301 = sbr.rel (%p298) target = $region36
      $region35: #{tpu_custom_call.1} parent=5 // pred_region
        %s302 = ssub.s32 %s22, 1
        %s303 = sand.u32 %s63, 1
        %s304 = scalar_lea.sflag [#allocation6], %s303
        %s305 = sand.u32 %s63, 1
        %s306 = scalar_lea.vmem [#allocation5], %s305
        // Predicated region
        $region37: #{tpu_custom_call.1} parent=35 // pred_check
          %p307 = pneg %p76
        $region38: #{tpu_custom_call.1} parent=35 // pred_check_branch
          %309 = sbr.rel (%p307) target = $region40
        $region39: #{tpu_custom_call.1} parent=35 // pred_region
          %310 = dma.done %s304, 16
        $region40: #{tpu_custom_call.1} parent=35 // pred_fallthru
          _
        %s311 = sand.u32 %s27, 1
        %s312 = scalar_lea.sflag [#allocation9], %s311
        %s313 = sand.u32 %s93, 1
        %s314 = smul.addr %s313, 8
        %s315 = scalar_lea.vmem [#allocation8], %s314
        // Predicated region
        $region41: #{tpu_custom_call.1} parent=35 // pred_check
          %p316 = pneg %p106
        $region42: #{tpu_custom_call.1} parent=35 // pred_check_branch
          %318 = sbr.rel (%p316) target = $region44
        $region43: #{tpu_custom_call.1} parent=35 // pred_region
          %319 = dma.done %s312, 128
        $region44: #{tpu_custom_call.1} parent=35 // pred_fallthru
          _
        %s320 = sand.u32 %s27, 1
        %s321 = scalar_lea.sflag [#allocation9], %s320
        %s322 = sand.u32 %s123, 1
        %s323 = smul.addr %s322, 8
        %s324 = scalar_lea.vmem [#allocation10], %s323
        // Predicated region
        $region45: #{tpu_custom_call.1} parent=35 // pred_check
          %p325 = pneg %p136
        $region46: #{tpu_custom_call.1} parent=35 // pred_check_branch
          %327 = sbr.rel (%p325) target = $region48
        $region47: #{tpu_custom_call.1} parent=35 // pred_region
          %328 = dma.done %s321, 128
        $region48: #{tpu_custom_call.1} parent=35 // pred_fallthru
          _
        %s329 = sand.u32 %s153, 1
        %s330 = scalar_lea.sflag [#allocation12], %s329
        %s331 = sand.u32 %s153, 1
        %s332 = smul.addr %s331, 8
        %s333 = scalar_lea.vmem [#allocation11], %s332
        // Predicated region
        $region49: #{tpu_custom_call.1} parent=35 // pred_check
          %p334 = pneg %p166
        $region50: #{tpu_custom_call.1} parent=35 // pred_check_branch
          %336 = sbr.rel (%p334) target = $region52
        $region51: #{tpu_custom_call.1} parent=35 // pred_region
          %337 = dma.done %s330, 128
        $region52: #{tpu_custom_call.1} parent=35 // pred_fallthru
          _
        %s338 = sand.u32 %s63, 1
        %s339 = scalar_lea.sflag [#allocation6], %s338
        %s340 = sand.u32 %s63, 1
        %s341 = scalar_lea.vmem [#allocation5], %s340
        %p342 = pneg %p76
        %p343 = pneg %p73
        %s344 = sand.u32 %s27, 1
        %s345 = scalar_lea.sflag [#allocation9], %s344
        %s346 = sand.u32 %s93, 1
        %s347 = smul.addr %s346, 8
        %s348 = scalar_lea.vmem [#allocation8], %s347
        %p349 = pneg %p106
        %p350 = pneg %p103
        %s351 = sand.u32 %s27, 1
        %s352 = scalar_lea.sflag [#allocation9], %s351
        %s353 = sand.u32 %s123, 1
        %s354 = smul.addr %s353, 8
        %s355 = scalar_lea.vmem [#allocation10], %s354
        %p356 = pneg %p136
        %p357 = pneg %p133
        %s358 = sand.u32 %s153, 1
        %s359 = scalar_lea.sflag [#allocation12], %s358
        %s360 = sand.u32 %s153, 1
        %s361 = smul.addr %s360, 8
        %s362 = scalar_lea.vmem [#allocation11], %s361
        %p363 = pneg %p166
        %p364 = pneg %p163
        %p365 = pneg %p196
        %p366 = pneg %p193
        %s367 = sand.u32 %s183, 1
        %s368 = scalar_lea.sflag [#allocation7], %s367
        %s369 = sand.u32 %s183, 1
        %s370 = smul.addr %s369, 8
        %s371 = scalar_lea.vmem [#allocation13], %s370
        %p372 = scmp.eq.s32.totalorder %s36, 0
        // Predicated region
        $region53: #{tpu_custom_call.1} parent=35 // pred_check
          %p373 = pneg %p372
        $region54: #{tpu_custom_call.1} parent=35 // pred_check_branch
          %375 = sbr.rel (%p373) target = $region56
        $region55: #{tpu_custom_call.1} parent=35 // pred_region
          %vm376 = vcmask 7168
          %377 = vst.msk [vmem:[#allocation2] sm:$0xff] %vm376, -1e+30
          %378 = vst.msk [vmem:[#allocation3] sm:$0xff] %vm376, 0.0
          %vm379 = vcmask 261120
          %380 = vst.msk [vmem:[#allocation4] sm:$0xff] %vm379, 0.0
        $region56: #{tpu_custom_call.1} parent=35 // pred_fallthru
          _
        %v381 = vld [vmem:[%s315] sm:$0xff]
        %v382 = vmul.f32 %v381, 0.25503486
        %v383 = vld [vmem:[%s324] sm:$0xff]
        %v384 = vld [vmem:[%s333] sm:$0xff]
        %v385 = vld [vmem:[%s306] sm:$0x1]
        %v386 = vsub.f32 %v385, 1.0
        %v387 = vmul.f32 %v386, 1442695.0
        %v389 = vlaneseq
        %v390 = vshrl.u32 %v389, 7
        %v391 = vsub.s32 0, %v390
        %v392 = vrot.slane %v387, %v391
        %vm394 = vcmask 261120
        %v396 = vsel %vm394, %v382, 0
        %v399 = vsel %vm394, %v383, 0
        %401 = vmatprep.subr.mxu0 0.0
        %402 = vmatpush1.xpose.msra.mxu0 %v399
        %403 = vmatprep.subr.mxu0 0.0
        %404 = vmatpush1.xpose.msra.mxu0 0.0
        %405 = vmatprep.subr.mxu0 0.0
        %406 = vmatpush1.xpose.msra.mxu0 0.0
        %407 = vmatprep.subr.mxu0 0.0
        %408 = vmatpush1.xpose.msra.mxu0 0.0
        %409 = vmatprep.subr.mxu0 0.0
        %410 = vmatpush1.xpose.msra.mxu0 0.0
        %411 = vmatprep.subr.mxu0 0.0
        %412 = vmatpush1.xpose.msra.mxu0 0.0
        %413 = vmatprep.subr.mxu0 0.0
        %414 = vmatpush1.xpose.msra.mxu0 0.0
        %415 = vmatprep.subr.mxu0 0.0
        %416 = vmatpush1.xpose.msra.mxu0 0.0
        %417 = vmatprep.subr.mxu0 0.0
        %418 = vmatpush1.xpose.msra.mxu0 0.0
        %419 = vmatprep.subr.mxu0 0.0
        %420 = vmatpush1.xpose.msra.mxu0 0.0
        %421 = vmatprep.subr.mxu0 0.0
        %422 = vmatpush1.xpose.msra.mxu0 0.0
        %423 = vmatprep.subr.mxu0 0.0
        %424 = vmatpush1.xpose.msra.mxu0 0.0
        %425 = vmatprep.subr.mxu0 0.0
        %426 = vmatpush1.xpose.msra.mxu0 0.0
        %427 = vmatprep.subr.mxu0 0.0
        %428 = vmatpush1.xpose.msra.mxu0 0.0
        %429 = vmatprep.subr.mxu0 0.0
        %430 = vmatpush1.xpose.msra.mxu0 0.0
        %431 = vmatprep.subr.mxu0 0.0
        %432 = vmatpush1.xpose.msra.mxu0 0.0
        %433 = vmatprep.subr.mxu0 0.0
        %434 = vmatpush1.xpose.msra.mxu0 0.0
        %435 = vmatprep.subr.mxu0 0.0
        %436 = vmatpush1.xpose.msra.mxu0 0.0
        %437 = vmatprep.subr.mxu0 0.0
        %438 = vmatpush1.xpose.msra.mxu0 0.0
        %439 = vmatprep.subr.mxu0 0.0
        %440 = vmatpush1.xpose.msra.mxu0 0.0
        %441 = vmatprep.subr.mxu0 0.0
        %442 = vmatpush1.xpose.msra.mxu0 0.0
        %443 = vmatprep.subr.mxu0 0.0
        %444 = vmatpush1.xpose.msra.mxu0 0.0
        %445 = vmatprep.subr.mxu0 0.0
        %446 = vmatpush1.xpose.msra.mxu0 0.0
        %447 = vmatprep.subr.mxu0 0.0
        %448 = vmatpush1.xpose.msra.mxu0 0.0
        %449 = vmatprep.subr.mxu0 0.0
        %450 = vmatpush1.xpose.msra.mxu0 0.0
        %451 = vmatprep.subr.mxu0 0.0
        %452 = vmatpush1.xpose.msra.mxu0 0.0
        %453 = vmatprep.subr.mxu0 0.0
        %454 = vmatpush1.xpose.msra.mxu0 0.0
        %455 = vmatprep.subr.mxu0 0.0
        %456 = vmatpush1.xpose.msra.mxu0 0.0
        %457 = vmatprep.subr.mxu0 0.0
        %458 = vmatpush1.xpose.msra.mxu0 0.0
        %459 = vmatprep.subr.mxu0 0.0
        %460 = vmatpush1.xpose.msra.mxu0 0.0
        %461 = vmatprep.subr.mxu0 0.0
        %462 = vmatpush1.xpose.msra.mxu0 0.0
        %463 = vmatprep.subr.mxu0 0.0
        %464 = vmatpush1.xpose.msra.mxu0 0.0
        %465 = vmatprep.mubr.f32.mxu0 0.0
        %466 = vmatmul.mubr.f32.gmra.mrb[0].mxu0 %v396
        %v467 = vpop.f32.mrb[0].mxu0
        %v468 = vadd.f32 %v392, %v467
        %v469 = vpop.f32.mrb[0].mxu0
        %470 = vdwg.mxu0
        %v471 = vld [vmem:[#allocation2] sm:$0xff]
        %vm472 = vcmask 64512
        %v473 = vsel %vm472, %v468, -inf
        %474 = vmax.xlane.f32.xlu0 %v473
        %v475 = vpop.xlane.xlu0 %474
        %v476 = vmax.f32 %v471, %v475
        %v477 = vsub.f32 %v471, %v476
        %v478 = vpow.pop %v477
        %480 = vset.pattern.permute.xlu0 0
        %481 = vperm.xlu0 %480, %v476
        %v482 = vpop.permute.xlu0 %481
        %v484 = vsub.f32 %v468, %v482
        %v485 = vpow.pop %v484
        %v486 = vld [vmem:[#allocation3] sm:$0xff]
        %v487 = vmul.f32 %v478, %v486
        %v488 = vsel %vm472, %v485, 0.0
        %489 = vadd.xlane.f32.xlu0 %v488
        %v490 = vpop.xlane.xlu0 %489
        %v491 = vadd.f32 %v487, %v490
        %vm492 = vcmask 7168
        %493 = vst.msk [vmem:[#allocation3] sm:$0xff] %vm492, %v491
        %v494 = vld [vmem:[#allocation4] sm:$0xff]
        %496 = vset.pattern.permute.xlu0 0
        %497 = vperm.xlu0 %496, %v478
        %v498 = vpop.permute.xlu0 %497
        %v500 = vmul.f32 %v498, %v494
        %v502 = vsel %vm472, %v485, 0
        %504 = vmatprep.subr.mxu0 0.0
        %505 = vmatpush1.msra.mxu0 %v384
        %506 = vmatprep.subr.mxu0 0.0
        %507 = vmatpush1.msra.mxu0 0.0
        %508 = vmatprep.subr.mxu0 0.0
        %509 = vmatpush1.msra.mxu0 0.0
        %510 = vmatprep.subr.mxu0 0.0
        %511 = vmatpush1.msra.mxu0 0.0
        %512 = vmatprep.subr.mxu0 0.0
        %513 = vmatpush1.msra.mxu0 0.0
        %514 = vmatprep.subr.mxu0 0.0
        %515 = vmatpush1.msra.mxu0 0.0
        %516 = vmatprep.subr.mxu0 0.0
        %517 = vmatpush1.msra.mxu0 0.0
        %518 = vmatprep.subr.mxu0 0.0
        %519 = vmatpush1.msra.mxu0 0.0
        %520 = vmatprep.subr.mxu0 0.0
        %521 = vmatpush1.msra.mxu0 0.0
        %522 = vmatprep.subr.mxu0 0.0
        %523 = vmatpush1.msra.mxu0 0.0
        %524 = vmatprep.subr.mxu0 0.0
        %525 = vmatpush1.msra.mxu0 0.0
        %526 = vmatprep.subr.mxu0 0.0
        %527 = vmatpush1.msra.mxu0 0.0
        %528 = vmatprep.subr.mxu0 0.0
        %529 = vmatpush1.msra.mxu0 0.0
        %530 = vmatprep.subr.mxu0 0.0
        %531 = vmatpush1.msra.mxu0 0.0
        %532 = vmatprep.subr.mxu0 0.0
        %533 = vmatpush1.msra.mxu0 0.0
        %534 = vmatprep.subr.mxu0 0.0
        %535 = vmatpush1.msra.mxu0 0.0
        %536 = vmatprep.subr.mxu0 0.0
        %537 = vmatpush1.msra.mxu0 0.0
        %538 = vmatprep.subr.mxu0 0.0
        %539 = vmatpush1.msra.mxu0 0.0
        %540 = vmatprep.subr.mxu0 0.0
        %541 = vmatpush1.msra.mxu0 0.0
        %542 = vmatprep.subr.mxu0 0.0
        %543 = vmatpush1.msra.mxu0 0.0
        %544 = vmatprep.subr.mxu0 0.0
        %545 = vmatpush1.msra.mxu0 0.0
        %546 = vmatprep.subr.mxu0 0.0
        %547 = vmatpush1.msra.mxu0 0.0
        %548 = vmatprep.subr.mxu0 0.0
        %549 = vmatpush1.msra.mxu0 0.0
        %550 = vmatprep.subr.mxu0 0.0
        %551 = vmatpush1.msra.mxu0 0.0
        %552 = vmatprep.subr.mxu0 0.0
        %553 = vmatpush1.msra.mxu0 0.0
        %554 = vmatprep.subr.mxu0 0.0
        %555 = vmatpush1.msra.mxu0 0.0
        %556 = vmatprep.subr.mxu0 0.0
        %557 = vmatpush1.msra.mxu0 0.0
        %558 = vmatprep.subr.mxu0 0.0
        %559 = vmatpush1.msra.mxu0 0.0
        %560 = vmatprep.subr.mxu0 0.0
        %561 = vmatpush1.msra.mxu0 0.0
        %562 = vmatprep.subr.mxu0 0.0
        %563 = vmatpush1.msra.mxu0 0.0
        %564 = vmatprep.subr.mxu0 0.0
        %565 = vmatpush1.msra.mxu0 0.0
        %566 = vmatprep.subr.mxu0 0.0
        %567 = vmatpush1.msra.mxu0 0.0
        %568 = vmatprep.mubr.f32.mxu0 0.0
        %569 = vmatmul.mubr.f32.gmra.mrb[0].mxu0 %v502
        %v570 = vpop.f32.mrb[0].mxu0
        %v571 = vadd.f32 0.0, %v570
        %v572 = vpop.f32.mrb[0].mxu0
        %573 = vdwg.mxu0
        %v574 = vadd.f32 %v500, %v571
        %575 = vst.msk [vmem:[#allocation4] sm:$0xff] %vm394, %v574
        %576 = vst.msk [vmem:[#allocation2] sm:$0xff] %vm492, %v476
        // Predicated region
        $region57: #{tpu_custom_call.1} parent=35 // pred_check
          %p577 = pneg %p372
        $region58: #{tpu_custom_call.1} parent=35 // pred_check_branch
          %579 = sbr.rel (%p577) target = $region60
        $region59: #{tpu_custom_call.1} parent=35 // pred_region
          %v580 = vld [vmem:[#allocation4] sm:$0xff]
          %v581 = vld [vmem:[#allocation3] sm:$0xff]
          %583 = vset.pattern.permute.xlu0 0
          %584 = vperm.xlu0 %583, %v581
          %v585 = vpop.permute.xlu0 %584
          %v587 = vrcp.pop %v585
          %v588 = vmul.f32 %v580, %v587
          %589 = vst.msk [vmem:[%s371] sm:$0xff] %vm394, %v588
        $region60: #{tpu_custom_call.1} parent=35 // pred_fallthru
          _
        %s590 = sand.u32 %s183, 1
        %s591 = scalar_lea.sflag [#allocation7], %s590
        %s592 = sand.u32 %s183, 1
        %s593 = smul.addr %s592, 8
        %s594 = scalar_lea.vmem [#allocation13], %s593
        // Predicated region
        $region61: #{tpu_custom_call.1} parent=35 // pred_check
          %p595 = pneg %p193
        $region62: #{tpu_custom_call.1} parent=35 // pred_check_branch
          %597 = sbr.rel (%p595) target = $region64
        $region63: #{tpu_custom_call.1} parent=35 // pred_region
          %s599 = ssub.s32 128, 128
          %600 = vsyncadd %s591, %s599
          %s601 = sadd.s32 %s35, %s34
          %s602 = smul.addr %s33, 4
          %s603 = sadd.s32 %s601, %s602
          %s604 = smul.addr %s603, 128
          %s605 = scalar_lea.hbm %s4, %s604
          %s607 = sshll.u32 %s594, 4
          %s608 = int_to_ptr.vmem [resolvable:$true] %s607
          %610 = dma.vmem_to_hbm [thread:$0]  %s608, 128, %s605, %s591
        $region64: #{tpu_custom_call.1} parent=35 // pred_fallthru
          _
      $region36: #{tpu_custom_call.1} parent=5 // pred_fallthru
        _
      %p611 = scmp.le.s32.totalorder 2, %s22
      // Predicated region
      $region65: #{tpu_custom_call.1} parent=5 // pred_check
        %p612 = pneg %p611
      $region66: #{tpu_custom_call.1} parent=5 // pred_check_branch
        %614 = sbr.rel (%p612) target = $region68
      $region67: #{tpu_custom_call.1} parent=5 // pred_region
        %s615 = ssub.s32 %s22, 2
        // Predicated region
        $region69: #{tpu_custom_call.1} parent=67 // pred_check
          %p616 = pneg %p199
        $region70: #{tpu_custom_call.1} parent=67 // pred_check_branch
          %618 = sbr.rel (%p616) target = $region72
        $region71: #{tpu_custom_call.1} parent=67 // pred_region
          %s619 = sand.u32 %s184, 1
          %s620 = scalar_lea.sflag [#allocation7], %s619
          %s621 = sand.u32 %s184, 1
          %s622 = smul.addr %s621, 8
          %s623 = scalar_lea.vmem [#allocation13], %s622
          %624 = dma.done %s620, 128
        $region72: #{tpu_custom_call.1} parent=67 // pred_fallthru
          _
      $region68: #{tpu_custom_call.1} parent=5 // pred_fallthru
        _
    $region6: #{tpu_custom_call.1} parent=1 // loop_footer
      %s26 = sadd.s32 1, %s22
    $region7: #{tpu_custom_call.1} parent=1 // loop_footer_branch
      %21 = sbr.rel target = $region3
    $region8: #{tpu_custom_call.1} parent=1 // loop_exit
      _
    %625 = vsyncpa [#allocation6], 1
    %s626 = scalar_lea.sflag [#allocation6], 1
    %627 = vsyncpa %s626, 1
    %628 = vsyncpa [#allocation9], 1
    %s629 = scalar_lea.sflag [#allocation9], 1
    %630 = vsyncpa %s629, 1
    %631 = vsyncpa [#allocation12], 1
    %s632 = scalar_lea.sflag [#allocation12], 1
    %633 = vsyncpa %s632, 1
    %634 = vsyncpa [#allocation7], 1
    %s635 = scalar_lea.sflag [#allocation7], 1
    %636 = vsyncpa %s635, 1

</llo_original>
